<compile_context>
chip_gen: v6e
topology: v6e:2x2x1
jax: 0.10.0
libtpu: 0.0.40
codegen_flags: <defaults>
</compile_context>

<pallas_src>
import functools
import math

import jax
import jax.numpy as jnp
from jax.experimental import pallas as pl
from jax.experimental.pallas import tpu as pltpu

# Module hyperparameters (stand-ins for sys.argv in the original script).
C = 2          # output classes
CHANNELS = 1
FEATS = 28
M = 4          # number of parallel linear layers (sys.argv[1])
ALPHA = 0.5    # nonlinearity coefficient (sys.argv[2])
D = CHANNELS * FEATS * FEATS  # 784


def _net_kernel(x_ref, w_ref, sel_ref, out_ref, *, alpha):
    """x_ref: (TB, D) f32; w_ref: (D, m*C) f32; sel_ref: (m*C, C) f32;
    out_ref: (TB, C) f32."""
    # Single fused MXU matmul over all m layers, f32 operands + f32 accumulation.
    y = jnp.dot(x_ref[...], w_ref[...], preferred_element_type=jnp.float32)
    # nonlinear(y) = y**3 + alpha*y == y * (y*y + alpha)   (one fewer VPU mul)
    y = y * (y * y + alpha)
    # Fold the sum over the m layer groups into the kernel via a tiny 0/1
    # selection matmul: out[:, k] = sum_j y[:, j*C + k]. MXU is otherwise idle
    # and this avoids writing a (B, m*C) slab + a separate XLA reduce launch.
    out_ref[...] = jnp.dot(y, sel_ref[...], preferred_element_type=jnp.float32)


def net_forward(x_nchw, w_stack, *, alpha, block_b=4096):
    """x_nchw: (B, channels, feats, feats) f32; w_stack: (m, C, D) as in torch."""
    b = x_nchw.shape[0]
    m, c, d = w_stack.shape

    # Glue (plain JAX, done once, no dtype cast):
    #  - flatten NCHW row-major (matches torch.reshape); free bitcast, stays f32
    #  - stack weights as a lane-major (D, m*C) MXU operand
    #  - 0/1 selection matrix summing the m groups of C output lanes
    x2d = x_nchw.reshape(b, d)
    w_all = jnp.transpose(w_stack, (2, 0, 1)).reshape(d, m * c)
    sel = jnp.tile(jnp.eye(c, dtype=jnp.float32), (m, 1))          # (m*C, C)

    # Batch tiling: 8-aligned tiles, capped at block_b; force >=2 grid steps
    # for mid/large B so both v7x TensorCores participate.
    half = -(-b // 2)                       # cdiv(b, 2)
    tb = min(block_b, max(8, 8 * (-(-half // 8))))
    n_blocks = -(-b // tb)
    b_pad = n_blocks * tb
    if b_pad != b:
        # nonlinearity(0) = 0 and padded rows are sliced off below.
        x2d = jnp.pad(x2d, ((0, b_pad - b), (0, 0)))

    kernel = functools.partial(_net_kernel, alpha=alpha)

    cost = pl.CostEstimate(
        flops=2 * b_pad * d * m * c + 3 * b_pad * m * c + 2 * b_pad * m * c * c,
        transcendentals=0,
        bytes_accessed=b_pad * d * 4 + d * m * c * 4 + m * c * c * 4
                       + b_pad * c * 4,
    )

    out = pl.pallas_call(
        kernel,
        out_shape=jax.ShapeDtypeStruct((b_pad, c), jnp.float32),
        grid_spec=pltpu.PrefetchScalarGridSpec(
            num_scalar_prefetch=0,
            grid=(n_blocks,),
            in_specs=[
                # x: batch-tiled, double-buffered by the BlockSpec pipeline.
                pl.BlockSpec((tb, d), lambda i: (i, 0)),
                # weights: constant block index -> stays VMEM-resident.
                pl.BlockSpec((d, m * c), lambda i: (0, 0)),
                # selection matrix: tiny, VMEM-resident.
                pl.BlockSpec((m * c, c), lambda i: (0, 0)),
            ],
            out_specs=pl.BlockSpec((tb, c), lambda i: (i, 0)),
        ),
        compiler_params=pltpu.CompilerParams(
            dimension_semantics=("parallel",),
            # ~34 MiB live (2x 4096x896 f32 x-buffers + small w/sel/out):
            # under v7x's 64 MiB physical VMEM, above v5e's 16 MiB default.
            vmem_limit_bytes=48 * 1024 * 1024,
        ),
        cost_estimate=cost,
    )(x2d, w_all, sel)

    if b_pad != b:
        out = out[:b]
    return out                                            # (B, C)


def init_weights(key, m, c, d):
    """Deterministic orthogonal init, mirroring nn.init.orthogonal_ per layer."""
    ortho = jax.nn.initializers.orthogonal()
    keys = jax.random.split(key, m)
    ws = [ortho(keys[i], (c, d), jnp.float32) for i in range(m)]
    return jnp.stack(ws, axis=0)                          # (m, C, D)


def reference_forward(x_nchw, w_stack, alpha):
    """Pure-JAX f32 reference (HIGHEST matmul precision)."""
    b = x_nchw.shape[0]
    x2d = x_nchw.reshape(b, -1)
    y = jnp.einsum("bd,mcd->bmc", x2d, w_stack,
                   preferred_element_type=jnp.float32,
                   precision=jax.lax.Precision.HIGHEST)
    y = y ** 3 + alpha * y
    return jnp.sum(y, axis=1)                             # (B, C)


if __name__ == "__main__":
    key = jax.random.PRNGKey(0)
    kx, kw = jax.random.split(key)

    B = 2
    x = jax.random.normal(kx, (B, CHANNELS, FEATS, FEATS), dtype=jnp.float32)
    w = init_weights(kw, M, C, D)

    out = net_forward(x, w, alpha=ALPHA)
    out = jax.block_until_ready(out)

    ref = reference_forward(x, w, ALPHA)
    assert out.shape == (B, C), out.shape
    # f32 operands on both sides; tolerance covers f32 accumulation-order /
    # MXU multi-pass rounding differences.
    assert jnp.allclose(out, ref, atol=2e-2, rtol=2e-2), (out, ref)

    print("KERNEL_OK")
</pallas_src>

<mosaic_0001>
module attributes {stable_mosaic.version = 11 : i64} {
  func.func @_net_kernel(%arg0: i32, %arg1: memref<8x784xf32, #tpu.memory_space<vmem>>, %arg2: memref<784x8xf32, #tpu.memory_space<vmem>>, %arg3: memref<8x2xf32, #tpu.memory_space<vmem>>, %arg4: memref<8x2xf32, #tpu.memory_space<vmem>>) attributes {dimension_semantics = [#tpu.dimension_semantics<parallel>], iteration_bounds = array<i64: 1>, scalar_prefetch = 0 : i64, scratch_operands = 0 : i64, tpu.core_type = #tpu.core_type<tc>, window_params = [{transform_indices = @transform_0, window_bounds = array<i64: 8, 784>}, {pipeline_mode = #tpu.pipeline_mode<synchronous>, transform_indices = @transform_1, window_bounds = array<i64: 784, 8>}, {pipeline_mode = #tpu.pipeline_mode<synchronous>, transform_indices = @transform_2, window_bounds = array<i64: 8, 2>}, {transform_indices = @transform_3, window_bounds = array<i64: 8, 2>}]} {
    %c0 = arith.constant 0 : index
    %c0_0 = arith.constant 0 : index
    %0 = vector.load %arg1[%c0, %c0_0] : memref<8x784xf32, #tpu.memory_space<vmem>>, vector<8x784xf32>
    %c0_1 = arith.constant 0 : index
    %c0_2 = arith.constant 0 : index
    %1 = vector.load %arg2[%c0_1, %c0_2] : memref<784x8xf32, #tpu.memory_space<vmem>>, vector<784x8xf32>
    %cst = arith.constant dense<0.000000e+00> : vector<8x8xf32>
    %2 = tpu.matmul %0, %1, %cst {dimension_numbers = #tpu.dot_dimension_numbers<[1], [0], [0], [1], [0, 0, 1, 1], [], []>} : vector<8x784xf32>, vector<784x8xf32>, vector<8x8xf32> -> vector<8x8xf32>
    %3 = arith.mulf %2, %2 : vector<8x8xf32>
    %cst_3 = arith.constant 5.000000e-01 : f32
    %4 = vector.broadcast %cst_3 : f32 to vector<8x8xf32>
    %5 = arith.addf %3, %4 : vector<8x8xf32>
    %6 = arith.mulf %2, %5 : vector<8x8xf32>
    %c0_4 = arith.constant 0 : index
    %c0_5 = arith.constant 0 : index
    %7 = vector.load %arg3[%c0_4, %c0_5] : memref<8x2xf32, #tpu.memory_space<vmem>>, vector<8x2xf32>
    %cst_6 = arith.constant dense<0.000000e+00> : vector<8x2xf32>
    %8 = tpu.matmul %6, %7, %cst_6 {dimension_numbers = #tpu.dot_dimension_numbers<[1], [0], [0], [1], [0, 0, 1, 1], [], []>} : vector<8x8xf32>, vector<8x2xf32>, vector<8x2xf32> -> vector<8x2xf32>
    %c0_7 = arith.constant 0 : index
    %c0_8 = arith.constant 0 : index
    %9 = vector.load %arg4[%c0_7, %c0_8] : memref<8x2xf32, #tpu.memory_space<vmem>>, vector<8x2xf32>
    tpu.vector_store %arg4[%c0_7, %c0_8], %8 {strides = array<i32>} : memref<8x2xf32, #tpu.memory_space<vmem>>, vector<8x2xf32>,
    return
  }
  func.func @transform_0(%arg0: i32) -> (i32, i32) {
    %c0_i32 = arith.constant 0 : i32
    %c0_i32_0 = arith.constant 0 : i32
    return %arg0, %c0_i32 : i32, i32
  }
  func.func @transform_1(%arg0: i32) -> (i32, i32) {
    %c0_i32 = arith.constant 0 : i32
    %c0_i32_0 = arith.constant 0 : i32
    %c0_i32_1 = arith.constant 0 : i32
    return %c0_i32, %c0_i32_0 : i32, i32
  }
  func.func @transform_2(%arg0: i32) -> (i32, i32) {
    %c0_i32 = arith.constant 0 : i32
    %c0_i32_0 = arith.constant 0 : i32
    %c0_i32_1 = arith.constant 0 : i32
    return %c0_i32, %c0_i32_0 : i32, i32
  }
  func.func @transform_3(%arg0: i32) -> (i32, i32) {
    %c0_i32 = arith.constant 0 : i32
    %c0_i32_0 = arith.constant 0 : i32
    return %arg0, %c0_i32 : i32, i32
  }
}

</mosaic_0001>

<llo_original>
// kernel: tpu_custom_call.1
$region0: #{tpu_custom_call.1}
  #allocation0 [shape = 'u32[]', space=smem, size = 0x4, offset = 0x4, fixed_abs, tag = 'smem constant byte address 0x4 - core index']
  #allocation1 [shape = 'u32[144,128]{1,0:T(1,128)}', space=vmem, size = 0x12000, scoped, tag = 'internal scratch']
  %s0 = inlined_call_operand.vmem [shape: f32[8,784], index: 0, kind: input, shape index: {}]
  %s1 = inlined_call_operand.vmem [shape: f32[784,8], index: 1, kind: input, shape index: {}]
  %s2 = inlined_call_operand.vmem [shape: f32[8,2], index: 2, kind: input, shape index: {}]
  %s3 = inlined_call_operand.vmem [shape: f32[8,2], index: 3, kind: output, shape index: {}]
  %s4 = sld [smem:[#allocation0]]
  $region22: #{tpu_custom_call.1} parent=0
    _
  %s6 = ssub.s32 1, %s4
  %s7 = scalar_select 0, %s6, %s4
  // Predicated region
  $region2: #{tpu_custom_call.1} parent=0 // pred_check
    _
  $region3: #{tpu_custom_call.1} parent=0 // pred_check_branch
    %9 = sbr.rel (0) target = $region5
  $region4: #{tpu_custom_call.1} parent=0 // pred_region
    _
  $region5: #{tpu_custom_call.1} parent=0 // pred_fallthru
    _
  // Predicated region
  $region6: #{tpu_custom_call.1} parent=0 // pred_check
    _
  $region7: #{tpu_custom_call.1} parent=0 // pred_check_branch
    %11 = sbr.rel (0) target = $region9
  $region8: #{tpu_custom_call.1} parent=0 // pred_region
    _
  $region9: #{tpu_custom_call.1} parent=0 // pred_fallthru
    _
  // Predicated region
  $region10: #{tpu_custom_call.1} parent=0 // pred_check
    _
  $region11: #{tpu_custom_call.1} parent=0 // pred_check_branch
    %13 = sbr.rel (0) target = $region13
  $region12: #{tpu_custom_call.1} parent=0 // pred_region
    _
  $region13: #{tpu_custom_call.1} parent=0 // pred_fallthru
    _
  %v14 = vld [vmem:[%s0] sm:$0xff]
  %v15 = vld [vmem:[%s0 + $0x8] sm:$0xff]
  %v16 = vld [vmem:[%s0 + $0x10] sm:$0xff]
  %v17 = vld [vmem:[%s0 + $0x18] sm:$0xff]
  %v18 = vld [vmem:[%s0 + $0x20] sm:$0xff]
  %v19 = vld [vmem:[%s0 + $0x28] sm:$0xff]
  %v20 = vld [vmem:[%s0 + $0x30] sm:$0xff]
  %v21 = vld [vmem:[%s1] sm:$0xff]
  %v22 = vld [vmem:[%s1 + $0x8] sm:$0xff]
  %v23 = vld [vmem:[%s1 + $0x10] sm:$0xff]
  %v24 = vld [vmem:[%s1 + $0x18] sm:$0xff]
  %v25 = vld [vmem:[%s1 + $0x20] sm:$0xff]
  %v26 = vld [vmem:[%s1 + $0x28] sm:$0xff]
  %v27 = vld [vmem:[%s1 + $0x30] sm:$0xff]
  %v28 = vld [vmem:[%s1 + $0x38] sm:$0xff]
  %v29 = vld [vmem:[%s1 + $0x40] sm:$0xff]
  %v30 = vld [vmem:[%s1 + $0x48] sm:$0xff]
  %v31 = vld [vmem:[%s1 + $0x50] sm:$0xff]
  %v32 = vld [vmem:[%s1 + $0x58] sm:$0xff]
  %v33 = vld [vmem:[%s1 + $0x60] sm:$0xff]
  %v34 = vld [vmem:[%s1 + $0x68] sm:$0xff]
  %v35 = vld [vmem:[%s1 + $0x70] sm:$0xff]
  %v36 = vld [vmem:[%s1 + $0x78] sm:$0xff]
  %v37 = vld [vmem:[%s1 + $0x80] sm:$0xff]
  %v38 = vld [vmem:[%s1 + $0x88] sm:$0xff]
  %v39 = vld [vmem:[%s1 + $0x90] sm:$0xff]
  %v40 = vld [vmem:[%s1 + $0x98] sm:$0xff]
  %v41 = vld [vmem:[%s1 + $0xa0] sm:$0xff]
  %v42 = vld [vmem:[%s1 + $0xa8] sm:$0xff]
  %v43 = vld [vmem:[%s1 + $0xb0] sm:$0xff]
  %v44 = vld [vmem:[%s1 + $0xb8] sm:$0xff]
  %v45 = vld [vmem:[%s1 + $0xc0] sm:$0xff]
  %v46 = vld [vmem:[%s1 + $0xc8] sm:$0xff]
  %v47 = vld [vmem:[%s1 + $0xd0] sm:$0xff]
  %v48 = vld [vmem:[%s1 + $0xd8] sm:$0xff]
  %v49 = vld [vmem:[%s1 + $0xe0] sm:$0xff]
  %v50 = vld [vmem:[%s1 + $0xe8] sm:$0xff]
  %v51 = vld [vmem:[%s1 + $0xf0] sm:$0xff]
  %v52 = vld [vmem:[%s1 + $0xf8] sm:$0xff]
  %v53 = vld [vmem:[%s1 + $0x100] sm:$0xff]
  %v54 = vld [vmem:[%s1 + $0x108] sm:$0xff]
  %v55 = vld [vmem:[%s1 + $0x110] sm:$0xff]
  %v56 = vld [vmem:[%s1 + $0x118] sm:$0xff]
  %v57 = vld [vmem:[%s1 + $0x120] sm:$0xff]
  %v58 = vld [vmem:[%s1 + $0x128] sm:$0xff]
  %v59 = vld [vmem:[%s1 + $0x130] sm:$0xff]
  %v60 = vld [vmem:[%s1 + $0x138] sm:$0xff]
  %v61 = vld [vmem:[%s1 + $0x140] sm:$0xff]
  %v62 = vld [vmem:[%s1 + $0x148] sm:$0xff]
  %v63 = vld [vmem:[%s1 + $0x150] sm:$0xff]
  %v64 = vld [vmem:[%s1 + $0x158] sm:$0xff]
  %v65 = vld [vmem:[%s1 + $0x160] sm:$0xff]
  %v66 = vld [vmem:[%s1 + $0x168] sm:$0xff]
  %v67 = vld [vmem:[%s1 + $0x170] sm:$0xff]
  %v68 = vld [vmem:[%s1 + $0x178] sm:$0xff]
  %v69 = vld [vmem:[%s1 + $0x180] sm:$0xff]
  %v70 = vld [vmem:[%s1 + $0x188] sm:$0xff]
  %v71 = vld [vmem:[%s1 + $0x190] sm:$0xff]
  %v72 = vld [vmem:[%s1 + $0x198] sm:$0xff]
  %v73 = vld [vmem:[%s1 + $0x1a0] sm:$0xff]
  %v74 = vld [vmem:[%s1 + $0x1a8] sm:$0xff]
  %v75 = vld [vmem:[%s1 + $0x1b0] sm:$0xff]
  %v76 = vld [vmem:[%s1 + $0x1b8] sm:$0xff]
  %v77 = vld [vmem:[%s1 + $0x1c0] sm:$0xff]
  %v78 = vld [vmem:[%s1 + $0x1c8] sm:$0xff]
  %v79 = vld [vmem:[%s1 + $0x1d0] sm:$0xff]
  %v80 = vld [vmem:[%s1 + $0x1d8] sm:$0xff]
  %v81 = vld [vmem:[%s1 + $0x1e0] sm:$0xff]
  %v82 = vld [vmem:[%s1 + $0x1e8] sm:$0xff]
  %v83 = vld [vmem:[%s1 + $0x1f0] sm:$0xff]
  %v84 = vld [vmem:[%s1 + $0x1f8] sm:$0xff]
  %v85 = vld [vmem:[%s1 + $0x200] sm:$0xff]
  %v86 = vld [vmem:[%s1 + $0x208] sm:$0xff]
  %v87 = vld [vmem:[%s1 + $0x210] sm:$0xff]
  %v88 = vld [vmem:[%s1 + $0x218] sm:$0xff]
  %v89 = vld [vmem:[%s1 + $0x220] sm:$0xff]
  %v90 = vld [vmem:[%s1 + $0x228] sm:$0xff]
  %v91 = vld [vmem:[%s1 + $0x230] sm:$0xff]
  %v92 = vld [vmem:[%s1 + $0x238] sm:$0xff]
  %v93 = vld [vmem:[%s1 + $0x240] sm:$0xff]
  %v94 = vld [vmem:[%s1 + $0x248] sm:$0xff]
  %v95 = vld [vmem:[%s1 + $0x250] sm:$0xff]
  %v96 = vld [vmem:[%s1 + $0x258] sm:$0xff]
  %v97 = vld [vmem:[%s1 + $0x260] sm:$0xff]
  %v98 = vld [vmem:[%s1 + $0x268] sm:$0xff]
  %v99 = vld [vmem:[%s1 + $0x270] sm:$0xff]
  %v100 = vld [vmem:[%s1 + $0x278] sm:$0xff]
  %v101 = vld [vmem:[%s1 + $0x280] sm:$0xff]
  %v102 = vld [vmem:[%s1 + $0x288] sm:$0xff]
  %v103 = vld [vmem:[%s1 + $0x290] sm:$0xff]
  %v104 = vld [vmem:[%s1 + $0x298] sm:$0xff]
  %v105 = vld [vmem:[%s1 + $0x2a0] sm:$0xff]
  %v106 = vld [vmem:[%s1 + $0x2a8] sm:$0xff]
  %v107 = vld [vmem:[%s1 + $0x2b0] sm:$0xff]
  %v108 = vld [vmem:[%s1 + $0x2b8] sm:$0xff]
  %v109 = vld [vmem:[%s1 + $0x2c0] sm:$0xff]
  %v110 = vld [vmem:[%s1 + $0x2c8] sm:$0xff]
  %v111 = vld [vmem:[%s1 + $0x2d0] sm:$0xff]
  %v112 = vld [vmem:[%s1 + $0x2d8] sm:$0xff]
  %v113 = vld [vmem:[%s1 + $0x2e0] sm:$0xff]
  %v114 = vld [vmem:[%s1 + $0x2e8] sm:$0xff]
  %v115 = vld [vmem:[%s1 + $0x2f0] sm:$0xff]
  %v116 = vld [vmem:[%s1 + $0x2f8] sm:$0xff]
  %v117 = vld [vmem:[%s1 + $0x300] sm:$0xff]
  %v118 = vld [vmem:[%s1 + $0x308] sm:$0xff]
  %vm119 = vcmask 130048
  %v121 = vsel %vm119, %v20, 0
  %123 = vmatprep.subr.mxu0 0.0
  %124 = vmatpush1.msra.mxu0 %v36
  %125 = vmatprep.subr.mxu0 0.0
  %126 = vmatpush1.msra.mxu0 %v35
  %127 = vmatprep.subr.mxu0 0.0
  %128 = vmatpush1.msra.mxu0 %v34
  %129 = vmatprep.subr.mxu0 0.0
  %130 = vmatpush1.msra.mxu0 %v33
  %131 = vmatprep.subr.mxu0 0.0
  %132 = vmatpush1.msra.mxu0 %v32
  %133 = vmatprep.subr.mxu0 0.0
  %134 = vmatpush1.msra.mxu0 %v31
  %135 = vmatprep.subr.mxu0 0.0
  %136 = vmatpush1.msra.mxu0 %v30
  %137 = vmatprep.subr.mxu0 0.0
  %138 = vmatpush1.msra.mxu0 %v29
  %139 = vmatprep.subr.mxu0 0.0
  %140 = vmatpush1.msra.mxu0 %v28
  %141 = vmatprep.subr.mxu0 0.0
  %142 = vmatpush1.msra.mxu0 %v27
  %143 = vmatprep.subr.mxu0 0.0
  %144 = vmatpush1.msra.mxu0 %v26
  %145 = vmatprep.subr.mxu0 0.0
  %146 = vmatpush1.msra.mxu0 %v25
  %147 = vmatprep.subr.mxu0 0.0
  %148 = vmatpush1.msra.mxu0 %v24
  %149 = vmatprep.subr.mxu0 0.0
  %150 = vmatpush1.msra.mxu0 %v23
  %151 = vmatprep.subr.mxu0 0.0
  %152 = vmatpush1.msra.mxu0 %v22
  %153 = vmatprep.subr.mxu0 0.0
  %154 = vmatpush1.msra.mxu0 %v21
  %155 = vmatprep.subr.mxu0 0.0
  %156 = vmatpush2.msra.mxu0 %v52
  %157 = vmatprep.subr.mxu0 0.0
  %158 = vmatpush2.msra.mxu0 %v51
  %159 = vmatprep.subr.mxu0 0.0
  %160 = vmatpush2.msra.mxu0 %v50
  %161 = vmatprep.subr.mxu0 0.0
  %162 = vmatpush2.msra.mxu0 %v49
  %163 = vmatprep.subr.mxu0 0.0
  %164 = vmatpush2.msra.mxu0 %v48
  %165 = vmatprep.subr.mxu0 0.0
  %166 = vmatpush2.msra.mxu0 %v47
  %167 = vmatprep.subr.mxu0 0.0
  %168 = vmatpush2.msra.mxu0 %v46
  %169 = vmatprep.subr.mxu0 0.0
  %170 = vmatpush2.msra.mxu0 %v45
  %171 = vmatprep.subr.mxu0 0.0
  %172 = vmatpush2.msra.mxu0 %v44
  %173 = vmatprep.subr.mxu0 0.0
  %174 = vmatpush2.msra.mxu0 %v43
  %175 = vmatprep.subr.mxu0 0.0
  %176 = vmatpush2.msra.mxu0 %v42
  %177 = vmatprep.subr.mxu0 0.0
  %178 = vmatpush2.msra.mxu0 %v41
  %179 = vmatprep.subr.mxu0 0.0
  %180 = vmatpush2.msra.mxu0 %v40
  %181 = vmatprep.subr.mxu0 0.0
  %182 = vmatpush2.msra.mxu0 %v39
  %183 = vmatprep.subr.mxu0 0.0
  %184 = vmatpush2.msra.mxu0 %v38
  %185 = vmatprep.subr.mxu0 0.0
  %186 = vmatpush2.msra.mxu0 %v37
  %187 = vmatprep.mubr.f32.mxu0 %v15
  %188 = vmatmul.mubr.f32.gmra.mxu0 %v14
  %v189 = vpop.f32.mrf.mxu0
  %v190 = vadd.f32 0.0, %v189
  %v191 = vpop.f32.mrf.mxu0
  %192 = vdwg.mxu0
  %193 = vmatprep.subr.mxu0 0.0
  %194 = vmatpush1.msra.mxu0 %v68
  %195 = vmatprep.subr.mxu0 0.0
  %196 = vmatpush1.msra.mxu0 %v67
  %197 = vmatprep.subr.mxu0 0.0
  %198 = vmatpush1.msra.mxu0 %v66
  %199 = vmatprep.subr.mxu0 0.0
  %200 = vmatpush1.msra.mxu0 %v65
  %201 = vmatprep.subr.mxu0 0.0
  %202 = vmatpush1.msra.mxu0 %v64
  %203 = vmatprep.subr.mxu0 0.0
  %204 = vmatpush1.msra.mxu0 %v63
  %205 = vmatprep.subr.mxu0 0.0
  %206 = vmatpush1.msra.mxu0 %v62
  %207 = vmatprep.subr.mxu0 0.0
  %208 = vmatpush1.msra.mxu0 %v61
  %209 = vmatprep.subr.mxu0 0.0
  %210 = vmatpush1.msra.mxu0 %v60
  %211 = vmatprep.subr.mxu0 0.0
  %212 = vmatpush1.msra.mxu0 %v59
  %213 = vmatprep.subr.mxu0 0.0
  %214 = vmatpush1.msra.mxu0 %v58
  %215 = vmatprep.subr.mxu0 0.0
  %216 = vmatpush1.msra.mxu0 %v57
  %217 = vmatprep.subr.mxu0 0.0
  %218 = vmatpush1.msra.mxu0 %v56
  %219 = vmatprep.subr.mxu0 0.0
  %220 = vmatpush1.msra.mxu0 %v55
  %221 = vmatprep.subr.mxu0 0.0
  %222 = vmatpush1.msra.mxu0 %v54
  %223 = vmatprep.subr.mxu0 0.0
  %224 = vmatpush1.msra.mxu0 %v53
  %225 = vmatprep.subr.mxu0 0.0
  %226 = vmatpush2.msra.mxu0 %v84
  %227 = vmatprep.subr.mxu0 0.0
  %228 = vmatpush2.msra.mxu0 %v83
  %229 = vmatprep.subr.mxu0 0.0
  %230 = vmatpush2.msra.mxu0 %v82
  %231 = vmatprep.subr.mxu0 0.0
  %232 = vmatpush2.msra.mxu0 %v81
  %233 = vmatprep.subr.mxu0 0.0
  %234 = vmatpush2.msra.mxu0 %v80
  %235 = vmatprep.subr.mxu0 0.0
  %236 = vmatpush2.msra.mxu0 %v79
  %237 = vmatprep.subr.mxu0 0.0
  %238 = vmatpush2.msra.mxu0 %v78
  %239 = vmatprep.subr.mxu0 0.0
  %240 = vmatpush2.msra.mxu0 %v77
  %241 = vmatprep.subr.mxu0 0.0
  %242 = vmatpush2.msra.mxu0 %v76
  %243 = vmatprep.subr.mxu0 0.0
  %244 = vmatpush2.msra.mxu0 %v75
  %245 = vmatprep.subr.mxu0 0.0
  %246 = vmatpush2.msra.mxu0 %v74
  %247 = vmatprep.subr.mxu0 0.0
  %248 = vmatpush2.msra.mxu0 %v73
  %249 = vmatprep.subr.mxu0 0.0
  %250 = vmatpush2.msra.mxu0 %v72
  %251 = vmatprep.subr.mxu0 0.0
  %252 = vmatpush2.msra.mxu0 %v71
  %253 = vmatprep.subr.mxu0 0.0
  %254 = vmatpush2.msra.mxu0 %v70
  %255 = vmatprep.subr.mxu0 0.0
  %256 = vmatpush2.msra.mxu0 %v69
  %257 = vmatprep.mubr.f32.mxu0 %v17
  %258 = vmatmul.mubr.f32.gmra.mxu0 %v16
  %v259 = vpop.f32.mrf.mxu0
  %v260 = vadd.f32 %v190, %v259
  %v261 = vpop.f32.mrf.mxu0
  %262 = vdwg.mxu0
  %263 = vmatprep.subr.mxu0 0.0
  %264 = vmatpush1.msra.mxu0 %v100
  %265 = vmatprep.subr.mxu0 0.0
  %266 = vmatpush1.msra.mxu0 %v99
  %267 = vmatprep.subr.mxu0 0.0
  %268 = vmatpush1.msra.mxu0 %v98
  %269 = vmatprep.subr.mxu0 0.0
  %270 = vmatpush1.msra.mxu0 %v97
  %271 = vmatprep.subr.mxu0 0.0
  %272 = vmatpush1.msra.mxu0 %v96
  %273 = vmatprep.subr.mxu0 0.0
  %274 = vmatpush1.msra.mxu0 %v95
  %275 = vmatprep.subr.mxu0 0.0
  %276 = vmatpush1.msra.mxu0 %v94
  %277 = vmatprep.subr.mxu0 0.0
  %278 = vmatpush1.msra.mxu0 %v93
  %279 = vmatprep.subr.mxu0 0.0
  %280 = vmatpush1.msra.mxu0 %v92
  %281 = vmatprep.subr.mxu0 0.0
  %282 = vmatpush1.msra.mxu0 %v91
  %283 = vmatprep.subr.mxu0 0.0
  %284 = vmatpush1.msra.mxu0 %v90
  %285 = vmatprep.subr.mxu0 0.0
  %286 = vmatpush1.msra.mxu0 %v89
  %287 = vmatprep.subr.mxu0 0.0
  %288 = vmatpush1.msra.mxu0 %v88
  %289 = vmatprep.subr.mxu0 0.0
  %290 = vmatpush1.msra.mxu0 %v87
  %291 = vmatprep.subr.mxu0 0.0
  %292 = vmatpush1.msra.mxu0 %v86
  %293 = vmatprep.subr.mxu0 0.0
  %294 = vmatpush1.msra.mxu0 %v85
  %295 = vmatprep.subr.mxu0 0.0
  %296 = vmatpush2.msra.mxu0 %v116
  %297 = vmatprep.subr.mxu0 0.0
  %298 = vmatpush2.msra.mxu0 %v115
  %299 = vmatprep.subr.mxu0 0.0
  %300 = vmatpush2.msra.mxu0 %v114
  %301 = vmatprep.subr.mxu0 0.0
  %302 = vmatpush2.msra.mxu0 %v113
  %303 = vmatprep.subr.mxu0 0.0
  %304 = vmatpush2.msra.mxu0 %v112
  %305 = vmatprep.subr.mxu0 0.0
  %306 = vmatpush2.msra.mxu0 %v111
  %307 = vmatprep.subr.mxu0 0.0
  %308 = vmatpush2.msra.mxu0 %v110
  %309 = vmatprep.subr.mxu0 0.0
  %310 = vmatpush2.msra.mxu0 %v109
  %311 = vmatprep.subr.mxu0 0.0
  %312 = vmatpush2.msra.mxu0 %v108
  %313 = vmatprep.subr.mxu0 0.0
  %314 = vmatpush2.msra.mxu0 %v107
  %315 = vmatprep.subr.mxu0 0.0
  %316 = vmatpush2.msra.mxu0 %v106
  %317 = vmatprep.subr.mxu0 0.0
  %318 = vmatpush2.msra.mxu0 %v105
  %319 = vmatprep.subr.mxu0 0.0
  %320 = vmatpush2.msra.mxu0 %v104
  %321 = vmatprep.subr.mxu0 0.0
  %322 = vmatpush2.msra.mxu0 %v103
  %323 = vmatprep.subr.mxu0 0.0
  %324 = vmatpush2.msra.mxu0 %v102
  %325 = vmatprep.subr.mxu0 0.0
  %326 = vmatpush2.msra.mxu0 %v101
  %327 = vmatprep.mubr.f32.mxu0 %v19
  %328 = vmatmul.mubr.f32.gmra.mxu0 %v18
  %v329 = vpop.f32.mrf.mxu0
  %v330 = vadd.f32 %v260, %v329
  %v331 = vpop.f32.mrf.mxu0
  %332 = vdwg.mxu0
  %333 = vmatprep.subr.mxu0 0.0
  %334 = vmatpush1.msra.mxu0 0.0
  %335 = vmatprep.subr.mxu0 0.0
  %336 = vmatpush1.msra.mxu0 0.0
  %337 = vmatprep.subr.mxu0 0.0
  %338 = vmatpush1.msra.mxu0 0.0
  %339 = vmatprep.subr.mxu0 0.0
  %340 = vmatpush1.msra.mxu0 0.0
  %341 = vmatprep.subr.mxu0 0.0
  %342 = vmatpush1.msra.mxu0 0.0
  %343 = vmatprep.subr.mxu0 0.0
  %344 = vmatpush1.msra.mxu0 0.0
  %345 = vmatprep.subr.mxu0 0.0
  %346 = vmatpush1.msra.mxu0 0.0
  %347 = vmatprep.subr.mxu0 0.0
  %348 = vmatpush1.msra.mxu0 0.0
  %349 = vmatprep.subr.mxu0 0.0
  %350 = vmatpush1.msra.mxu0 0.0
  %351 = vmatprep.subr.mxu0 0.0
  %352 = vmatpush1.msra.mxu0 0.0
  %353 = vmatprep.subr.mxu0 0.0
  %354 = vmatpush1.msra.mxu0 0.0
  %355 = vmatprep.subr.mxu0 0.0
  %356 = vmatpush1.msra.mxu0 0.0
  %357 = vmatprep.subr.mxu0 0.0
  %358 = vmatpush1.msra.mxu0 0.0
  %359 = vmatprep.subr.mxu0 0.0
  %360 = vmatpush1.msra.mxu0 0.0
  %361 = vmatprep.subr.mxu0 0.0
  %362 = vmatpush1.msra.mxu0 %v118
  %363 = vmatprep.subr.mxu0 0.0
  %364 = vmatpush1.msra.mxu0 %v117
  %365 = vmatprep.subr.mxu0 0.0
  %366 = vmatpush2.msra.mxu0 0.0
  %367 = vmatprep.subr.mxu0 0.0
  %368 = vmatpush2.msra.mxu0 0.0
  %369 = vmatprep.subr.mxu0 0.0
  %370 = vmatpush2.msra.mxu0 0.0
  %371 = vmatprep.subr.mxu0 0.0
  %372 = vmatpush2.msra.mxu0 0.0
  %373 = vmatprep.subr.mxu0 0.0
  %374 = vmatpush2.msra.mxu0 0.0
  %375 = vmatprep.subr.mxu0 0.0
  %376 = vmatpush2.msra.mxu0 0.0
  %377 = vmatprep.subr.mxu0 0.0
  %378 = vmatpush2.msra.mxu0 0.0
  %379 = vmatprep.subr.mxu0 0.0
  %380 = vmatpush2.msra.mxu0 0.0
  %381 = vmatprep.subr.mxu0 0.0
  %382 = vmatpush2.msra.mxu0 0.0
  %383 = vmatprep.subr.mxu0 0.0
  %384 = vmatpush2.msra.mxu0 0.0
  %385 = vmatprep.subr.mxu0 0.0
  %386 = vmatpush2.msra.mxu0 0.0
  %387 = vmatprep.subr.mxu0 0.0
  %388 = vmatpush2.msra.mxu0 0.0
  %389 = vmatprep.subr.mxu0 0.0
  %390 = vmatpush2.msra.mxu0 0.0
  %391 = vmatprep.subr.mxu0 0.0
  %392 = vmatpush2.msra.mxu0 0.0
  %393 = vmatprep.subr.mxu0 0.0
  %394 = vmatpush2.msra.mxu0 0.0
  %395 = vmatprep.subr.mxu0 0.0
  %396 = vmatpush2.msra.mxu0 0.0
  %397 = vmatprep.mubr.f32.mxu0 0.0
  %398 = vmatmul.mubr.f32.gmra.mxu0 %v121
  %v399 = vpop.f32.mrf.mxu0
  %v400 = vadd.f32 %v330, %v399
  %v401 = vpop.f32.mrf.mxu0
  %402 = vdwg.mxu0
  %v403 = vmul.f32 %v400, %v400
  %v404 = vadd.f32 %v403, 0.5
  %v405 = vmul.f32 %v400, %v404
  %v406 = vld [vmem:[%s2] sm:$0xff]
  %vm407 = vcmask 64512
  %v409 = vsel %vm407, %v405, 0
  %411 = vmatprep.subr.mxu0 0.0
  %412 = vmatpush1.msra.mxu0 0.0
  %413 = vmatprep.subr.mxu0 0.0
  %414 = vmatpush1.msra.mxu0 0.0
  %415 = vmatprep.subr.mxu0 0.0
  %416 = vmatpush1.msra.mxu0 0.0
  %417 = vmatprep.subr.mxu0 0.0
  %418 = vmatpush1.msra.mxu0 0.0
  %419 = vmatprep.subr.mxu0 0.0
  %420 = vmatpush1.msra.mxu0 0.0
  %421 = vmatprep.subr.mxu0 0.0
  %422 = vmatpush1.msra.mxu0 0.0
  %423 = vmatprep.subr.mxu0 0.0
  %424 = vmatpush1.msra.mxu0 0.0
  %425 = vmatprep.subr.mxu0 0.0
  %426 = vmatpush1.msra.mxu0 0.0
  %427 = vmatprep.subr.mxu0 0.0
  %428 = vmatpush1.msra.mxu0 0.0
  %429 = vmatprep.subr.mxu0 0.0
  %430 = vmatpush1.msra.mxu0 0.0
  %431 = vmatprep.subr.mxu0 0.0
  %432 = vmatpush1.msra.mxu0 0.0
  %433 = vmatprep.subr.mxu0 0.0
  %434 = vmatpush1.msra.mxu0 0.0
  %435 = vmatprep.subr.mxu0 0.0
  %436 = vmatpush1.msra.mxu0 0.0
  %437 = vmatprep.subr.mxu0 0.0
  %438 = vmatpush1.msra.mxu0 0.0
  %439 = vmatprep.subr.mxu0 0.0
  %440 = vmatpush1.msra.mxu0 0.0
  %441 = vmatprep.subr.mxu0 0.0
  %442 = vmatpush1.msra.mxu0 %v406
  %443 = vmatprep.subr.mxu0 0.0
  %444 = vmatpush2.msra.mxu0 0.0
  %445 = vmatprep.subr.mxu0 0.0
  %446 = vmatpush2.msra.mxu0 0.0
  %447 = vmatprep.subr.mxu0 0.0
  %448 = vmatpush2.msra.mxu0 0.0
  %449 = vmatprep.subr.mxu0 0.0
  %450 = vmatpush2.msra.mxu0 0.0
  %451 = vmatprep.subr.mxu0 0.0
  %452 = vmatpush2.msra.mxu0 0.0
  %453 = vmatprep.subr.mxu0 0.0
  %454 = vmatpush2.msra.mxu0 0.0
  %455 = vmatprep.subr.mxu0 0.0
  %456 = vmatpush2.msra.mxu0 0.0
  %457 = vmatprep.subr.mxu0 0.0
  %458 = vmatpush2.msra.mxu0 0.0
  %459 = vmatprep.subr.mxu0 0.0
  %460 = vmatpush2.msra.mxu0 0.0
  %461 = vmatprep.subr.mxu0 0.0
  %462 = vmatpush2.msra.mxu0 0.0
  %463 = vmatprep.subr.mxu0 0.0
  %464 = vmatpush2.msra.mxu0 0.0
  %465 = vmatprep.subr.mxu0 0.0
  %466 = vmatpush2.msra.mxu0 0.0
  %467 = vmatprep.subr.mxu0 0.0
  %468 = vmatpush2.msra.mxu0 0.0
  %469 = vmatprep.subr.mxu0 0.0
  %470 = vmatpush2.msra.mxu0 0.0
  %471 = vmatprep.subr.mxu0 0.0
  %472 = vmatpush2.msra.mxu0 0.0
  %473 = vmatprep.subr.mxu0 0.0
  %474 = vmatpush2.msra.mxu0 0.0
  %475 = vmatprep.mubr.f32.mxu0 0.0
  %476 = vmatmul.mubr.f32.gmra.mxu0 %v409
  %v477 = vpop.f32.mrf.mxu0
  %v478 = vadd.f32 0.0, %v477
  %v479 = vpop.f32.mrf.mxu0
  %480 = vdwg.mxu0
  %vm481 = vcmask 15360
  %482 = vst.msk [vmem:[%s3] sm:$0xff] %vm481, %v478
  // Predicated region
  $region14: #{tpu_custom_call.1} parent=0 // pred_check
    _
  $region15: #{tpu_custom_call.1} parent=0 // pred_check_branch
    %484 = sbr.rel (0) target = $region17
  $region16: #{tpu_custom_call.1} parent=0 // pred_region
    _
  $region17: #{tpu_custom_call.1} parent=0 // pred_fallthru
    _
  // Predicated region
  $region18: #{tpu_custom_call.1} parent=0 // pred_check
    _
  $region19: #{tpu_custom_call.1} parent=0 // pred_check_branch
    %486 = sbr.rel (0) target = $region21
  $region20: #{tpu_custom_call.1} parent=0 // pred_region
    _
  $region21: #{tpu_custom_call.1} parent=0 // pred_fallthru
    _

</llo_original>
